<compile_context>
chip_gen: v7x
topology: tpu7x:2x2x1
jax: 0.10.0
libtpu: 0.0.40
codegen_flags: <defaults>
</compile_context>

<pallas_src>
import jax
import jax.numpy as jnp
from jax.experimental import pallas as pl
from jax.experimental.pallas import tpu as pltpu

_BN_EPS = 1e-5
_PAD = 128                         # lane-aligned width used for every hidden layer
_HIDDEN = (128, 64, 32, 16, 8)     # real widths of the 5 BatchNorm'd hidden layers


def _model2pca_kernel(x_ref, w1_ref, w2_ref, w3_ref, w4_ref, w5_ref, vp_ref, o_ref):
    """Whole forward pass in one kernel; everything is VMEM resident.

    vp_ref is a packed (12, 128) f32 tile:
      rows 0..4  : BN gamma for layers 1..5 (zero in padded lanes)
      rows 5..9  : BN beta  for layers 1..5 (zero in padded lanes)
      row 10     : final linear weight (8->1) as a zero-padded row vector
      row 11     : lane 0 holds the final bias
    """
    inv_b = 1.0 / x_ref.shape[0]

    def bn_relu(h, gamma, beta):
        # Single-pass batch statistics (training-mode BatchNorm1d, biased var).
        s = jnp.sum(h, axis=0, keepdims=True)
        ss = jnp.sum(h * h, axis=0, keepdims=True)
        mu = s * inv_b
        var = ss * inv_b - mu * mu
        # Fused affine: hn = h * scale + shift  (2 VALU ops per element).
        scale = gamma * jax.lax.rsqrt(var + _BN_EPS)
        shift = beta - mu * scale
        return jnp.maximum(h * scale + shift, 0.0)

    x = x_ref[...]

    h = jnp.dot(x, w1_ref[...], preferred_element_type=jnp.float32)
    h = bn_relu(h, vp_ref[0:1, :], vp_ref[5:6, :])

    h = jnp.dot(h, w2_ref[...], preferred_element_type=jnp.float32)
    h = bn_relu(h, vp_ref[1:2, :], vp_ref[6:7, :])

    h = jnp.dot(h, w3_ref[...], preferred_element_type=jnp.float32)
    h = bn_relu(h, vp_ref[2:3, :], vp_ref[7:8, :])

    h = jnp.dot(h, w4_ref[...], preferred_element_type=jnp.float32)
    h = bn_relu(h, vp_ref[3:4, :], vp_ref[8:9, :])

    h = jnp.dot(h, w5_ref[...], preferred_element_type=jnp.float32)
    h = bn_relu(h, vp_ref[4:5, :], vp_ref[9:10, :])

    # Final 8 -> 1 layer as a lane reduction (avoid an N=1 MXU pass).
    w6_row = vp_ref[10:11, :]                       # (1, 128), zero-padded
    b6 = vp_ref[11:12, 0:1]                         # (1, 1)
    o_ref[...] = jnp.sum(h * w6_row, axis=1, keepdims=True) + b6


def init_params(key, in_features):
    """PyTorch-style uniform fan-in init; returns (kernel_params, raw_params)."""
    dims = [(in_features, 128), (128, 64), (64, 32), (32, 16), (16, 8), (8, 1)]
    ws, bs = [], []
    for fan_in, fan_out in dims:
        key, kw, kb = jax.random.split(key, 3)
        bound = float(fan_in) ** -0.5
        ws.append(jax.random.uniform(kw, (fan_in, fan_out), jnp.float32, -bound, bound))
        bs.append(jax.random.uniform(kb, (fan_out,), jnp.float32, -bound, bound))
    w1, w2, w3, w4, w5, w6 = ws

    def pad_to(w, rows, cols):
        out = jnp.zeros((rows, cols), jnp.float32)
        return out.at[: w.shape[0], : w.shape[1]].set(w)

    # Zero-pad hidden weights to lane-dense (128, 128) tiles; exact because the
    # padded activation columns are forced to zero by zero gamma/beta.
    w2p, w3p, w4p, w5p = (pad_to(w, _PAD, _PAD) for w in (w2, w3, w4, w5))

    # Pack all small per-feature vectors into a single (12, 128) tile.
    vp = jnp.zeros((12, _PAD), jnp.float32)
    for i, n in enumerate(_HIDDEN):
        vp = vp.at[i, :n].set(1.0)        # BN gamma (PyTorch init: ones)
        # rows 5..9 (BN beta) stay zero   # PyTorch init: zeros
    vp = vp.at[10, : w6.shape[0]].set(w6[:, 0])   # final weight as a row
    vp = vp.at[11, 0].set(bs[-1][0])              # final bias
    # Linear biases b1..b5 are exactly cancelled by the following BatchNorm's
    # mean subtraction, so they are never shipped to the kernel.

    kernel_params = (w1, w2p, w3p, w4p, w5p, vp)
    raw_params = (ws, bs)
    return kernel_params, raw_params


@jax.jit
def model2pca_forward(x, params):
    vmem = pl.BlockSpec(memory_space=pltpu.MemorySpace.VMEM)
    return pl.pallas_call(
        _model2pca_kernel,
        out_shape=jax.ShapeDtypeStruct((x.shape[0], 1), jnp.float32),
        in_specs=[vmem] * (1 + len(params)),
        out_specs=vmem,
    )(x, *params)


def _reference_forward(x, raw_params):
    """Pure-JAX reference matching the PyTorch forward (training-mode BN)."""
    ws, bs = raw_params

    def bn_relu(h):
        mu = jnp.mean(h, axis=0, keepdims=True)
        var = jnp.mean((h - mu) ** 2, axis=0, keepdims=True)
        return jnp.maximum((h - mu) / jnp.sqrt(var + _BN_EPS), 0.0)

    h = x
    for i in range(5):
        h = bn_relu(h @ ws[i] + bs[i])    # biases included here on purpose
    return h @ ws[5] + bs[5]


if __name__ == "__main__":
    key = jax.random.PRNGKey(0)
    key, kx, kp = jax.random.split(key, 3)

    batch = 8
    in_features = 32   # e.g. PCA-reduced feature dimension

    x = jax.random.normal(kx, (batch, in_features), jnp.float32)
    kernel_params, raw_params = init_params(kp, in_features)

    out = model2pca_forward(x, kernel_params)
    out = jax.block_until_ready(out)

    assert out.shape == (batch, 1)
    assert out.dtype == jnp.float32

    ref = _reference_forward(x, raw_params)
    assert jnp.allclose(out, ref, rtol=1e-3, atol=1e-3), (out, ref)

    print("KERNEL_OK")
</pallas_src>

<mosaic_0001>
module attributes {stable_mosaic.version = 11 : i64} {
  func.func @_model2pca_kernel(%arg0: memref<8x32xf32, #tpu.memory_space<vmem>>, %arg1: memref<32x128xf32, #tpu.memory_space<vmem>>, %arg2: memref<128x128xf32, #tpu.memory_space<vmem>>, %arg3: memref<128x128xf32, #tpu.memory_space<vmem>>, %arg4: memref<128x128xf32, #tpu.memory_space<vmem>>, %arg5: memref<128x128xf32, #tpu.memory_space<vmem>>, %arg6: memref<12x128xf32, #tpu.memory_space<vmem>>, %arg7: memref<8x1xf32, #tpu.memory_space<vmem>>) attributes {dimension_semantics = [], scalar_prefetch = 0 : i64, scratch_operands = 0 : i64, tpu.core_type = #tpu.core_type<tc>} {
    %c0 = arith.constant 0 : index
    %c0_0 = arith.constant 0 : index
    %0 = vector.load %arg0[%c0, %c0_0] : memref<8x32xf32, #tpu.memory_space<vmem>>, vector<8x32xf32>
    %c0_1 = arith.constant 0 : index
    %c0_2 = arith.constant 0 : index
    %1 = vector.load %arg1[%c0_1, %c0_2] : memref<32x128xf32, #tpu.memory_space<vmem>>, vector<32x128xf32>
    %cst = arith.constant dense<0.000000e+00> : vector<8x128xf32>
    %2 = tpu.matmul %0, %1, %cst {dimension_numbers = #tpu.dot_dimension_numbers<[1], [0], [0], [1], [0, 0, 1, 1], [], []>} : vector<8x32xf32>, vector<32x128xf32>, vector<8x128xf32> -> vector<8x128xf32>
    %c0_3 = arith.constant 0 : index
    %c0_4 = arith.constant 0 : index
    %3 = vector.load %arg6[%c0_3, %c0_4] : memref<12x128xf32, #tpu.memory_space<vmem>>, vector<1x128xf32>
    %c5 = arith.constant 5 : index
    %c0_5 = arith.constant 0 : index
    %4 = vector.load %arg6[%c5, %c0_5] : memref<12x128xf32, #tpu.memory_space<vmem>>, vector<1x128xf32>
    %cst_6 = arith.constant dense<0.000000e+00> : vector<128xf32>
    %5 = vector.multi_reduction <add>, %2, %cst_6 [0] : vector<8x128xf32> to vector<128xf32>
    %6 = vector.shape_cast %5 : vector<128xf32> to vector<1x128xf32>
    %7 = arith.mulf %2, %2 : vector<8x128xf32>
    %cst_7 = arith.constant dense<0.000000e+00> : vector<128xf32>
    %8 = vector.multi_reduction <add>, %7, %cst_7 [0] : vector<8x128xf32> to vector<128xf32>
    %9 = vector.shape_cast %8 : vector<128xf32> to vector<1x128xf32>
    %cst_8 = arith.constant 1.250000e-01 : f32
    %10 = vector.broadcast %cst_8 : f32 to vector<1x128xf32>
    %11 = arith.mulf %6, %10 : vector<1x128xf32>
    %cst_9 = arith.constant 1.250000e-01 : f32
    %12 = vector.broadcast %cst_9 : f32 to vector<1x128xf32>
    %13 = arith.mulf %9, %12 : vector<1x128xf32>
    %14 = arith.mulf %11, %11 : vector<1x128xf32>
    %15 = arith.subf %13, %14 : vector<1x128xf32>
    %cst_10 = arith.constant 9.99999974E-6 : f32
    %16 = vector.broadcast %cst_10 : f32 to vector<1x128xf32>
    %17 = arith.addf %15, %16 : vector<1x128xf32>
    %18 = math.rsqrt %17 : vector<1x128xf32>
    %19 = arith.mulf %3, %18 : vector<1x128xf32>
    %20 = arith.mulf %11, %19 : vector<1x128xf32>
    %21 = arith.subf %4, %20 : vector<1x128xf32>
    %22 = vector.broadcast %19 : vector<1x128xf32> to vector<8x128xf32>
    %23 = arith.mulf %2, %22 : vector<8x128xf32>
    %24 = vector.broadcast %21 : vector<1x128xf32> to vector<8x128xf32>
    %25 = arith.addf %23, %24 : vector<8x128xf32>
    %cst_11 = arith.constant 0.000000e+00 : f32
    %26 = vector.broadcast %cst_11 : f32 to vector<8x128xf32>
    %27 = arith.maximumf %25, %26 : vector<8x128xf32>
    %c0_12 = arith.constant 0 : index
    %c0_13 = arith.constant 0 : index
    %28 = vector.load %arg2[%c0_12, %c0_13] : memref<128x128xf32, #tpu.memory_space<vmem>>, vector<128x128xf32>
    %cst_14 = arith.constant dense<0.000000e+00> : vector<8x128xf32>
    %29 = tpu.matmul %27, %28, %cst_14 {dimension_numbers = #tpu.dot_dimension_numbers<[1], [0], [0], [1], [0, 0, 1, 1], [], []>} : vector<8x128xf32>, vector<128x128xf32>, vector<8x128xf32> -> vector<8x128xf32>
    %c1 = arith.constant 1 : index
    %c0_15 = arith.constant 0 : index
    %30 = vector.load %arg6[%c1, %c0_15] : memref<12x128xf32, #tpu.memory_space<vmem>>, vector<1x128xf32>
    %c6 = arith.constant 6 : index
    %c0_16 = arith.constant 0 : index
    %31 = vector.load %arg6[%c6, %c0_16] : memref<12x128xf32, #tpu.memory_space<vmem>>, vector<1x128xf32>
    %cst_17 = arith.constant dense<0.000000e+00> : vector<128xf32>
    %32 = vector.multi_reduction <add>, %29, %cst_17 [0] : vector<8x128xf32> to vector<128xf32>
    %33 = vector.shape_cast %32 : vector<128xf32> to vector<1x128xf32>
    %34 = arith.mulf %29, %29 : vector<8x128xf32>
    %cst_18 = arith.constant dense<0.000000e+00> : vector<128xf32>
    %35 = vector.multi_reduction <add>, %34, %cst_18 [0] : vector<8x128xf32> to vector<128xf32>
    %36 = vector.shape_cast %35 : vector<128xf32> to vector<1x128xf32>
    %cst_19 = arith.constant 1.250000e-01 : f32
    %37 = vector.broadcast %cst_19 : f32 to vector<1x128xf32>
    %38 = arith.mulf %33, %37 : vector<1x128xf32>
    %cst_20 = arith.constant 1.250000e-01 : f32
    %39 = vector.broadcast %cst_20 : f32 to vector<1x128xf32>
    %40 = arith.mulf %36, %39 : vector<1x128xf32>
    %41 = arith.mulf %38, %38 : vector<1x128xf32>
    %42 = arith.subf %40, %41 : vector<1x128xf32>
    %cst_21 = arith.constant 9.99999974E-6 : f32
    %43 = vector.broadcast %cst_21 : f32 to vector<1x128xf32>
    %44 = arith.addf %42, %43 : vector<1x128xf32>
    %45 = math.rsqrt %44 : vector<1x128xf32>
    %46 = arith.mulf %30, %45 : vector<1x128xf32>
    %47 = arith.mulf %38, %46 : vector<1x128xf32>
    %48 = arith.subf %31, %47 : vector<1x128xf32>
    %49 = vector.broadcast %46 : vector<1x128xf32> to vector<8x128xf32>
    %50 = arith.mulf %29, %49 : vector<8x128xf32>
    %51 = vector.broadcast %48 : vector<1x128xf32> to vector<8x128xf32>
    %52 = arith.addf %50, %51 : vector<8x128xf32>
    %cst_22 = arith.constant 0.000000e+00 : f32
    %53 = vector.broadcast %cst_22 : f32 to vector<8x128xf32>
    %54 = arith.maximumf %52, %53 : vector<8x128xf32>
    %c0_23 = arith.constant 0 : index
    %c0_24 = arith.constant 0 : index
    %55 = vector.load %arg3[%c0_23, %c0_24] : memref<128x128xf32, #tpu.memory_space<vmem>>, vector<128x128xf32>
    %cst_25 = arith.constant dense<0.000000e+00> : vector<8x128xf32>
    %56 = tpu.matmul %54, %55, %cst_25 {dimension_numbers = #tpu.dot_dimension_numbers<[1], [0], [0], [1], [0, 0, 1, 1], [], []>} : vector<8x128xf32>, vector<128x128xf32>, vector<8x128xf32> -> vector<8x128xf32>
    %c2 = arith.constant 2 : index
    %c0_26 = arith.constant 0 : index
    %57 = vector.load %arg6[%c2, %c0_26] : memref<12x128xf32, #tpu.memory_space<vmem>>, vector<1x128xf32>
    %c7 = arith.constant 7 : index
    %c0_27 = arith.constant 0 : index
    %58 = vector.load %arg6[%c7, %c0_27] : memref<12x128xf32, #tpu.memory_space<vmem>>, vector<1x128xf32>
    %cst_28 = arith.constant dense<0.000000e+00> : vector<128xf32>
    %59 = vector.multi_reduction <add>, %56, %cst_28 [0] : vector<8x128xf32> to vector<128xf32>
    %60 = vector.shape_cast %59 : vector<128xf32> to vector<1x128xf32>
    %61 = arith.mulf %56, %56 : vector<8x128xf32>
    %cst_29 = arith.constant dense<0.000000e+00> : vector<128xf32>
    %62 = vector.multi_reduction <add>, %61, %cst_29 [0] : vector<8x128xf32> to vector<128xf32>
    %63 = vector.shape_cast %62 : vector<128xf32> to vector<1x128xf32>
    %cst_30 = arith.constant 1.250000e-01 : f32
    %64 = vector.broadcast %cst_30 : f32 to vector<1x128xf32>
    %65 = arith.mulf %60, %64 : vector<1x128xf32>
    %cst_31 = arith.constant 1.250000e-01 : f32
    %66 = vector.broadcast %cst_31 : f32 to vector<1x128xf32>
    %67 = arith.mulf %63, %66 : vector<1x128xf32>
    %68 = arith.mulf %65, %65 : vector<1x128xf32>
    %69 = arith.subf %67, %68 : vector<1x128xf32>
    %cst_32 = arith.constant 9.99999974E-6 : f32
    %70 = vector.broadcast %cst_32 : f32 to vector<1x128xf32>
    %71 = arith.addf %69, %70 : vector<1x128xf32>
    %72 = math.rsqrt %71 : vector<1x128xf32>
    %73 = arith.mulf %57, %72 : vector<1x128xf32>
    %74 = arith.mulf %65, %73 : vector<1x128xf32>
    %75 = arith.subf %58, %74 : vector<1x128xf32>
    %76 = vector.broadcast %73 : vector<1x128xf32> to vector<8x128xf32>
    %77 = arith.mulf %56, %76 : vector<8x128xf32>
    %78 = vector.broadcast %75 : vector<1x128xf32> to vector<8x128xf32>
    %79 = arith.addf %77, %78 : vector<8x128xf32>
    %cst_33 = arith.constant 0.000000e+00 : f32
    %80 = vector.broadcast %cst_33 : f32 to vector<8x128xf32>
    %81 = arith.maximumf %79, %80 : vector<8x128xf32>
    %c0_34 = arith.constant 0 : index
    %c0_35 = arith.constant 0 : index
    %82 = vector.load %arg4[%c0_34, %c0_35] : memref<128x128xf32, #tpu.memory_space<vmem>>, vector<128x128xf32>
    %cst_36 = arith.constant dense<0.000000e+00> : vector<8x128xf32>
    %83 = tpu.matmul %81, %82, %cst_36 {dimension_numbers = #tpu.dot_dimension_numbers<[1], [0], [0], [1], [0, 0, 1, 1], [], []>} : vector<8x128xf32>, vector<128x128xf32>, vector<8x128xf32> -> vector<8x128xf32>
    %c3 = arith.constant 3 : index
    %c0_37 = arith.constant 0 : index
    %84 = vector.load %arg6[%c3, %c0_37] : memref<12x128xf32, #tpu.memory_space<vmem>>, vector<1x128xf32>
    %c8 = arith.constant 8 : index
    %c0_38 = arith.constant 0 : index
    %85 = vector.load %arg6[%c8, %c0_38] : memref<12x128xf32, #tpu.memory_space<vmem>>, vector<1x128xf32>
    %cst_39 = arith.constant dense<0.000000e+00> : vector<128xf32>
    %86 = vector.multi_reduction <add>, %83, %cst_39 [0] : vector<8x128xf32> to vector<128xf32>
    %87 = vector.shape_cast %86 : vector<128xf32> to vector<1x128xf32>
    %88 = arith.mulf %83, %83 : vector<8x128xf32>
    %cst_40 = arith.constant dense<0.000000e+00> : vector<128xf32>
    %89 = vector.multi_reduction <add>, %88, %cst_40 [0] : vector<8x128xf32> to vector<128xf32>
    %90 = vector.shape_cast %89 : vector<128xf32> to vector<1x128xf32>
    %cst_41 = arith.constant 1.250000e-01 : f32
    %91 = vector.broadcast %cst_41 : f32 to vector<1x128xf32>
    %92 = arith.mulf %87, %91 : vector<1x128xf32>
    %cst_42 = arith.constant 1.250000e-01 : f32
    %93 = vector.broadcast %cst_42 : f32 to vector<1x128xf32>
    %94 = arith.mulf %90, %93 : vector<1x128xf32>
    %95 = arith.mulf %92, %92 : vector<1x128xf32>
    %96 = arith.subf %94, %95 : vector<1x128xf32>
    %cst_43 = arith.constant 9.99999974E-6 : f32
    %97 = vector.broadcast %cst_43 : f32 to vector<1x128xf32>
    %98 = arith.addf %96, %97 : vector<1x128xf32>
    %99 = math.rsqrt %98 : vector<1x128xf32>
    %100 = arith.mulf %84, %99 : vector<1x128xf32>
    %101 = arith.mulf %92, %100 : vector<1x128xf32>
    %102 = arith.subf %85, %101 : vector<1x128xf32>
    %103 = vector.broadcast %100 : vector<1x128xf32> to vector<8x128xf32>
    %104 = arith.mulf %83, %103 : vector<8x128xf32>
    %105 = vector.broadcast %102 : vector<1x128xf32> to vector<8x128xf32>
    %106 = arith.addf %104, %105 : vector<8x128xf32>
    %cst_44 = arith.constant 0.000000e+00 : f32
    %107 = vector.broadcast %cst_44 : f32 to vector<8x128xf32>
    %108 = arith.maximumf %106, %107 : vector<8x128xf32>
    %c0_45 = arith.constant 0 : index
    %c0_46 = arith.constant 0 : index
    %109 = vector.load %arg5[%c0_45, %c0_46] : memref<128x128xf32, #tpu.memory_space<vmem>>, vector<128x128xf32>
    %cst_47 = arith.constant dense<0.000000e+00> : vector<8x128xf32>
    %110 = tpu.matmul %108, %109, %cst_47 {dimension_numbers = #tpu.dot_dimension_numbers<[1], [0], [0], [1], [0, 0, 1, 1], [], []>} : vector<8x128xf32>, vector<128x128xf32>, vector<8x128xf32> -> vector<8x128xf32>
    %c4 = arith.constant 4 : index
    %c0_48 = arith.constant 0 : index
    %111 = vector.load %arg6[%c4, %c0_48] : memref<12x128xf32, #tpu.memory_space<vmem>>, vector<1x128xf32>
    %c9 = arith.constant 9 : index
    %c0_49 = arith.constant 0 : index
    %112 = vector.load %arg6[%c9, %c0_49] : memref<12x128xf32, #tpu.memory_space<vmem>>, vector<1x128xf32>
    %cst_50 = arith.constant dense<0.000000e+00> : vector<128xf32>
    %113 = vector.multi_reduction <add>, %110, %cst_50 [0] : vector<8x128xf32> to vector<128xf32>
    %114 = vector.shape_cast %113 : vector<128xf32> to vector<1x128xf32>
    %115 = arith.mulf %110, %110 : vector<8x128xf32>
    %cst_51 = arith.constant dense<0.000000e+00> : vector<128xf32>
    %116 = vector.multi_reduction <add>, %115, %cst_51 [0] : vector<8x128xf32> to vector<128xf32>
    %117 = vector.shape_cast %116 : vector<128xf32> to vector<1x128xf32>
    %cst_52 = arith.constant 1.250000e-01 : f32
    %118 = vector.broadcast %cst_52 : f32 to vector<1x128xf32>
    %119 = arith.mulf %114, %118 : vector<1x128xf32>
    %cst_53 = arith.constant 1.250000e-01 : f32
    %120 = vector.broadcast %cst_53 : f32 to vector<1x128xf32>
    %121 = arith.mulf %117, %120 : vector<1x128xf32>
    %122 = arith.mulf %119, %119 : vector<1x128xf32>
    %123 = arith.subf %121, %122 : vector<1x128xf32>
    %cst_54 = arith.constant 9.99999974E-6 : f32
    %124 = vector.broadcast %cst_54 : f32 to vector<1x128xf32>
    %125 = arith.addf %123, %124 : vector<1x128xf32>
    %126 = math.rsqrt %125 : vector<1x128xf32>
    %127 = arith.mulf %111, %126 : vector<1x128xf32>
    %128 = arith.mulf %119, %127 : vector<1x128xf32>
    %129 = arith.subf %112, %128 : vector<1x128xf32>
    %130 = vector.broadcast %127 : vector<1x128xf32> to vector<8x128xf32>
    %131 = arith.mulf %110, %130 : vector<8x128xf32>
    %132 = vector.broadcast %129 : vector<1x128xf32> to vector<8x128xf32>
    %133 = arith.addf %131, %132 : vector<8x128xf32>
    %cst_55 = arith.constant 0.000000e+00 : f32
    %134 = vector.broadcast %cst_55 : f32 to vector<8x128xf32>
    %135 = arith.maximumf %133, %134 : vector<8x128xf32>
    %c10 = arith.constant 10 : index
    %c0_56 = arith.constant 0 : index
    %136 = vector.load %arg6[%c10, %c0_56] : memref<12x128xf32, #tpu.memory_space<vmem>>, vector<1x128xf32>
    %c11 = arith.constant 11 : index
    %c0_57 = arith.constant 0 : index
    %137 = vector.load %arg6[%c11, %c0_57] : memref<12x128xf32, #tpu.memory_space<vmem>>, vector<1x1xf32>
    %138 = vector.broadcast %136 : vector<1x128xf32> to vector<8x128xf32>
    %139 = arith.mulf %135, %138 : vector<8x128xf32>
    %cst_58 = arith.constant dense<0.000000e+00> : vector<8xf32>
    %140 = vector.multi_reduction <add>, %139, %cst_58 [1] : vector<8x128xf32> to vector<8xf32>
    %141 = vector.shape_cast %140 : vector<8xf32> to vector<8x1xf32>
    %142 = vector.broadcast %137 : vector<1x1xf32> to vector<8x1xf32>
    %143 = arith.addf %141, %142 : vector<8x1xf32>
    %c0_59 = arith.constant 0 : index
    %c0_60 = arith.constant 0 : index
    %144 = vector.load %arg7[%c0_59, %c0_60] : memref<8x1xf32, #tpu.memory_space<vmem>>, vector<8x1xf32>
    tpu.vector_store %arg7[%c0_59, %c0_60], %143 {strides = array<i32>} : memref<8x1xf32, #tpu.memory_space<vmem>>, vector<8x1xf32>,
    return
  }
}

</mosaic_0001>

<llo_original>
// kernel: model2pca_forward.1
$region0: #{model2pca_forward.1}
  #allocation0 [shape = 'u32[]', space=smem, size = 0x4, offset = 0x4, fixed_abs, tag = 'smem constant byte address 0x4 - core index']
  #allocation1 [shape = 'u32[144,128]{1,0:T(1,128)}', space=vmem, size = 0x12000, scoped, tag = 'internal scratch']
  %s0 = inlined_call_operand.hbm [shape: f32[8,32], index: 0, kind: input, shape index: {}]
  %s1 = inlined_call_operand.hbm [shape: f32[32,128], index: 1, kind: input, shape index: {}]
  %s2 = inlined_call_operand.hbm [shape: f32[128,128], index: 2, kind: input, shape index: {}]
  %s3 = inlined_call_operand.hbm [shape: f32[128,128], index: 3, kind: input, shape index: {}]
  %s4 = inlined_call_operand.hbm [shape: f32[128,128], index: 4, kind: input, shape index: {}]
  %s5 = inlined_call_operand.hbm [shape: f32[128,128], index: 5, kind: input, shape index: {}]
  %s6 = inlined_call_operand.vmem [shape: f32[12,128], index: 6, kind: input, shape index: {}]
  %s7 = inlined_call_operand.vmem [shape: f32[8,1], index: 7, kind: output, shape index: {}]
  %s8 = sld [smem:[#allocation0]]
  $region62: #{model2pca_forward.1} parent=0
    _
  %s10 = ssub.s32 1, %s8
  %s11 = scalar_select 0, %s10, %s8
  $region1: #{model2pca_forward.1} parent=0
    #allocation2 [shape = 'u8[4096]{0}', space=vmem, size = 0x1000, scoped, tag = 'input window, operand 0, single buffered']
    #allocation3 [shape = 's32[1]{0}', space=sflag, size = 0x4, scoped, tag = 'scoped memory for model2pca_forward.1']
    #allocation4 [shape = 'u8[16384]{0}', space=vmem, size = 0x4000, scoped, tag = 'input window, operand 1, single buffered']
    #allocation5 [shape = 's32[1]{0}', space=sflag, size = 0x4, scoped, tag = 'scoped memory for model2pca_forward.1']
    #allocation6 [shape = 'u8[65536]{0}', space=vmem, size = 0x10000, scoped, tag = 'input window, operand 2, single buffered']
    #allocation7 [shape = 'u8[65536]{0}', space=vmem, size = 0x10000, scoped, tag = 'input window, operand 3, single buffered']
    #allocation8 [shape = 's32[1]{0}', space=sflag, size = 0x4, scoped, tag = 'scoped memory for model2pca_forward.1']
    #allocation9 [shape = 'u8[65536]{0}', space=vmem, size = 0x10000, scoped, tag = 'input window, operand 4, single buffered']
    #allocation10 [shape = 'u8[65536]{0}', space=vmem, size = 0x10000, scoped, tag = 'input window, operand 5, single buffered']
    #allocation11 [shape = 's32[1]{0}', space=sflag, size = 0x4, scoped, tag = 'scoped memory for model2pca_forward.1']
    %12 = vsyncpa [#allocation3], 0
    %13 = vsyncpa [#allocation5], 0
    %14 = vsyncpa [#allocation8], 0
    %15 = vsyncpa [#allocation11], 0
    // Predicated region
    $region2: #{model2pca_forward.1} parent=1 // pred_check
      _
    $region3: #{model2pca_forward.1} parent=1 // pred_check_branch
      %17 = sbr.rel (0) target = $region5
    $region4: #{model2pca_forward.1} parent=1 // pred_region
      %s19 = ssub.s32 128, 128
      %20 = vsyncadd [#allocation3], %s19
      %s22 = sshll.u32 [#allocation2], 4
      %s23 = int_to_ptr.vmem [resolvable:$true] %s22
      %25 = dma.hbm_to_vmem [thread:$0]  %s0, 128, %s23, [#allocation3]
    $region5: #{model2pca_forward.1} parent=1 // pred_fallthru
      _
    // Predicated region
    $region6: #{model2pca_forward.1} parent=1 // pred_check
      _
    $region7: #{model2pca_forward.1} parent=1 // pred_check_branch
      %27 = sbr.rel (0) target = $region9
    $region8: #{model2pca_forward.1} parent=1 // pred_region
      %s29 = ssub.s32 512, 512
      %30 = vsyncadd [#allocation5], %s29
      %s31 = sshll.u32 [#allocation4], 4
      %s32 = int_to_ptr.vmem [resolvable:$true] %s31
      %37 = dma.hbm_to_vmem [thread:$0]  %s1, 512, %s32, [#allocation5], 128, 128, 8
    $region9: #{model2pca_forward.1} parent=1 // pred_fallthru
      _
    // Predicated region
    $region10: #{model2pca_forward.1} parent=1 // pred_check
      _
    $region11: #{model2pca_forward.1} parent=1 // pred_check_branch
      %39 = sbr.rel (0) target = $region13
    $region12: #{model2pca_forward.1} parent=1 // pred_region
      %s41 = ssub.s32 2048, 2048
      %42 = vsyncadd [#allocation5], %s41
      %s43 = sshll.u32 [#allocation6], 4
      %s44 = int_to_ptr.vmem [resolvable:$true] %s43
      %49 = dma.hbm_to_vmem [thread:$0]  %s2, 2048, %s44, [#allocation5], 128, 128, 8
    $region13: #{model2pca_forward.1} parent=1 // pred_fallthru
      _
    // Predicated region
    $region14: #{model2pca_forward.1} parent=1 // pred_check
      _
    $region15: #{model2pca_forward.1} parent=1 // pred_check_branch
      %51 = sbr.rel (0) target = $region17
    $region16: #{model2pca_forward.1} parent=1 // pred_region
      %s53 = ssub.s32 2048, 2048
      %54 = vsyncadd [#allocation8], %s53
      %s55 = sshll.u32 [#allocation7], 4
      %s56 = int_to_ptr.vmem [resolvable:$true] %s55
      %61 = dma.hbm_to_vmem [thread:$0]  %s3, 2048, %s56, [#allocation8], 128, 128, 8
    $region17: #{model2pca_forward.1} parent=1 // pred_fallthru
      _
    // Predicated region
    $region18: #{model2pca_forward.1} parent=1 // pred_check
      _
    $region19: #{model2pca_forward.1} parent=1 // pred_check_branch
      %63 = sbr.rel (0) target = $region21
    $region20: #{model2pca_forward.1} parent=1 // pred_region
      %s65 = ssub.s32 2048, 2048
      %66 = vsyncadd [#allocation8], %s65
      %s67 = sshll.u32 [#allocation9], 4
      %s68 = int_to_ptr.vmem [resolvable:$true] %s67
      %73 = dma.hbm_to_vmem [thread:$0]  %s4, 2048, %s68, [#allocation8], 128, 128, 8
    $region21: #{model2pca_forward.1} parent=1 // pred_fallthru
      _
    // Predicated region
    $region22: #{model2pca_forward.1} parent=1 // pred_check
      _
    $region23: #{model2pca_forward.1} parent=1 // pred_check_branch
      %75 = sbr.rel (0) target = $region25
    $region24: #{model2pca_forward.1} parent=1 // pred_region
      %s77 = ssub.s32 2048, 2048
      %78 = vsyncadd [#allocation11], %s77
      %s79 = sshll.u32 [#allocation10], 4
      %s80 = int_to_ptr.vmem [resolvable:$true] %s79
      %85 = dma.hbm_to_vmem [thread:$0]  %s5, 2048, %s80, [#allocation11], 128, 128, 8
    $region25: #{model2pca_forward.1} parent=1 // pred_fallthru
      _
    // Predicated region
    $region26: #{model2pca_forward.1} parent=1 // pred_check
      _
    $region27: #{model2pca_forward.1} parent=1 // pred_check_branch
      %87 = sbr.rel (0) target = $region29
    $region28: #{model2pca_forward.1} parent=1 // pred_region
      _
    $region29: #{model2pca_forward.1} parent=1 // pred_fallthru
      _
    // Predicated region
    $region30: #{model2pca_forward.1} parent=1 // pred_check
      _
    $region31: #{model2pca_forward.1} parent=1 // pred_check_branch
      %89 = sbr.rel (0) target = $region33
    $region32: #{model2pca_forward.1} parent=1 // pred_region
      %90 = dma.done [#allocation3], 128
    $region33: #{model2pca_forward.1} parent=1 // pred_fallthru
      _
    // Predicated region
    $region34: #{model2pca_forward.1} parent=1 // pred_check
      _
    $region35: #{model2pca_forward.1} parent=1 // pred_check_branch
      %92 = sbr.rel (0) target = $region37
    $region36: #{model2pca_forward.1} parent=1 // pred_region
      %93 = dma.done [#allocation5], 512
    $region37: #{model2pca_forward.1} parent=1 // pred_fallthru
      _
    // Predicated region
    $region38: #{model2pca_forward.1} parent=1 // pred_check
      _
    $region39: #{model2pca_forward.1} parent=1 // pred_check_branch
      %95 = sbr.rel (0) target = $region41
    $region40: #{model2pca_forward.1} parent=1 // pred_region
      %96 = dma.done [#allocation5], 2048
    $region41: #{model2pca_forward.1} parent=1 // pred_fallthru
      _
    // Predicated region
    $region42: #{model2pca_forward.1} parent=1 // pred_check
      _
    $region43: #{model2pca_forward.1} parent=1 // pred_check_branch
      %98 = sbr.rel (0) target = $region45
    $region44: #{model2pca_forward.1} parent=1 // pred_region
      %99 = dma.done [#allocation8], 2048
    $region45: #{model2pca_forward.1} parent=1 // pred_fallthru
      _
    // Predicated region
    $region46: #{model2pca_forward.1} parent=1 // pred_check
      _
    $region47: #{model2pca_forward.1} parent=1 // pred_check_branch
      %101 = sbr.rel (0) target = $region49
    $region48: #{model2pca_forward.1} parent=1 // pred_region
      %102 = dma.done [#allocation8], 2048
    $region49: #{model2pca_forward.1} parent=1 // pred_fallthru
      _
    // Predicated region
    $region50: #{model2pca_forward.1} parent=1 // pred_check
      _
    $region51: #{model2pca_forward.1} parent=1 // pred_check_branch
      %104 = sbr.rel (0) target = $region53
    $region52: #{model2pca_forward.1} parent=1 // pred_region
      %105 = dma.done [#allocation11], 2048
    $region53: #{model2pca_forward.1} parent=1 // pred_fallthru
      _
    %v106 = vld [vmem:[#allocation2] sm:$0xff]
    %v107 = vld [vmem:[#allocation4] sm:$0xff]
    %v108 = vld [vmem:[#allocation4 + $0x8] sm:$0xff]
    %v109 = vld [vmem:[#allocation4 + $0x10] sm:$0xff]
    %v110 = vld [vmem:[#allocation4 + $0x18] sm:$0xff]
    %vm111 = vcmask 261120
    %v113 = vsel %vm111, %v106, 0
    %115 = vmatprep.subr.mxu0 0.0
    %116 = vmatpush1.msra.mxu0 %v107
    %117 = vmatprep.subr.mxu0 0.0
    %118 = vmatpush1.msra.mxu0 %v108
    %119 = vmatprep.subr.mxu0 0.0
    %120 = vmatpush1.msra.mxu0 %v109
    %121 = vmatprep.subr.mxu0 0.0
    %122 = vmatpush1.msra.mxu0 %v110
    %123 = vmatprep.subr.mxu0 0.0
    %124 = vmatpush1.msra.mxu0 0.0
    %125 = vmatprep.subr.mxu0 0.0
    %126 = vmatpush1.msra.mxu0 0.0
    %127 = vmatprep.subr.mxu0 0.0
    %128 = vmatpush1.msra.mxu0 0.0
    %129 = vmatprep.subr.mxu0 0.0
    %130 = vmatpush1.msra.mxu0 0.0
    %131 = vmatprep.subr.mxu0 0.0
    %132 = vmatpush1.msra.mxu0 0.0
    %133 = vmatprep.subr.mxu0 0.0
    %134 = vmatpush1.msra.mxu0 0.0
    %135 = vmatprep.subr.mxu0 0.0
    %136 = vmatpush1.msra.mxu0 0.0
    %137 = vmatprep.subr.mxu0 0.0
    %138 = vmatpush1.msra.mxu0 0.0
    %139 = vmatprep.subr.mxu0 0.0
    %140 = vmatpush1.msra.mxu0 0.0
    %141 = vmatprep.subr.mxu0 0.0
    %142 = vmatpush1.msra.mxu0 0.0
    %143 = vmatprep.subr.mxu0 0.0
    %144 = vmatpush1.msra.mxu0 0.0
    %145 = vmatprep.subr.mxu0 0.0
    %146 = vmatpush1.msra.mxu0 0.0
    %147 = vmatprep.subr.mxu0 0.0
    %148 = vmatpush1.msra.mxu0 0.0
    %149 = vmatprep.subr.mxu0 0.0
    %150 = vmatpush1.msra.mxu0 0.0
    %151 = vmatprep.subr.mxu0 0.0
    %152 = vmatpush1.msra.mxu0 0.0
    %153 = vmatprep.subr.mxu0 0.0
    %154 = vmatpush1.msra.mxu0 0.0
    %155 = vmatprep.subr.mxu0 0.0
    %156 = vmatpush1.msra.mxu0 0.0
    %157 = vmatprep.subr.mxu0 0.0
    %158 = vmatpush1.msra.mxu0 0.0
    %159 = vmatprep.subr.mxu0 0.0
    %160 = vmatpush1.msra.mxu0 0.0
    %161 = vmatprep.subr.mxu0 0.0
    %162 = vmatpush1.msra.mxu0 0.0
    %163 = vmatprep.subr.mxu0 0.0
    %164 = vmatpush1.msra.mxu0 0.0
    %165 = vmatprep.subr.mxu0 0.0
    %166 = vmatpush1.msra.mxu0 0.0
    %167 = vmatprep.subr.mxu0 0.0
    %168 = vmatpush1.msra.mxu0 0.0
    %169 = vmatprep.subr.mxu0 0.0
    %170 = vmatpush1.msra.mxu0 0.0
    %171 = vmatprep.subr.mxu0 0.0
    %172 = vmatpush1.msra.mxu0 0.0
    %173 = vmatprep.subr.mxu0 0.0
    %174 = vmatpush1.msra.mxu0 0.0
    %175 = vmatprep.subr.mxu0 0.0
    %176 = vmatpush1.msra.mxu0 0.0
    %177 = vmatprep.subr.mxu0 0.0
    %178 = vmatpush1.msra.mxu0 0.0
    %179 = vmatprep.mubr.f32.mxu0 0.0
    %180 = vmatmul.mubr.f32.gmra.mrb[0].mxu0 %v113
    %v181 = vpop.f32.mrb[0].mxu0
    %v182 = vadd.f32 0.0, %v181
    %v183 = vpop.f32.mrb[0].mxu0
    %184 = vdwg.mxu0
    %v185 = vld [vmem:[%s6] sm:$0x1]
    %v186 = vld [vmem:[%s6 + $0x5] sm:$0x1]
    %v187 = vrot.slane %v182, 4
    %v188 = vadd.f32 %v182, %v187
    %v189 = vrot.slane %v188, 2
    %v190 = vadd.f32 %v188, %v189
    %v191 = vrot.slane %v190, 1
    %v192 = vadd.f32 %v190, %v191
    %v193 = vmul.f32 %v182, %v182
    %v194 = vrot.slane %v193, 4
    %v195 = vadd.f32 %v193, %v194
    %v196 = vrot.slane %v195, 2
    %v197 = vadd.f32 %v195, %v196
    %v198 = vrot.slane %v197, 1
    %v199 = vadd.f32 %v197, %v198
    %v200 = vmul.f32 %v192, 0.125
    %v201 = vmul.f32 %v199, 0.125
    %v202 = vmul.f32 %v200, %v200
    %v203 = vsub.f32 %v201, %v202
    %v204 = vadd.f32 %v203, 1e-05
    %v205 = vrsqrt.pop %v204
    %v206 = vmul.f32 %v185, %v205
    %v207 = vmul.f32 %v200, %v206
    %v208 = vsub.f32 %v186, %v207
    %v209 = vlaneseq
    %v210 = vshrl.u32 %v209, 7
    %v211 = vsub.s32 0, %v210
    %v212 = vrot.slane %v206, %v211
    %v213 = vmul.f32 %v182, %v212
    %v214 = vlaneseq
    %v215 = vshrl.u32 %v214, 7
    %v216 = vsub.s32 0, %v215
    %v217 = vrot.slane %v208, %v216
    %v218 = vadd.f32 %v213, %v217
    %v219 = vmax.f32 %v218, 0.0
    %v220 = vld [vmem:[#allocation6] sm:$0xff]
    %v221 = vld [vmem:[#allocation6 + $0x8] sm:$0xff]
    %v222 = vld [vmem:[#allocation6 + $0x10] sm:$0xff]
    %v223 = vld [vmem:[#allocation6 + $0x18] sm:$0xff]
    %v224 = vld [vmem:[#allocation6 + $0x20] sm:$0xff]
    %v225 = vld [vmem:[#allocation6 + $0x28] sm:$0xff]
    %v226 = vld [vmem:[#allocation6 + $0x30] sm:$0xff]
    %v227 = vld [vmem:[#allocation6 + $0x38] sm:$0xff]
    %v228 = vld [vmem:[#allocation6 + $0x40] sm:$0xff]
    %v229 = vld [vmem:[#allocation6 + $0x48] sm:$0xff]
    %v230 = vld [vmem:[#allocation6 + $0x50] sm:$0xff]
    %v231 = vld [vmem:[#allocation6 + $0x58] sm:$0xff]
    %v232 = vld [vmem:[#allocation6 + $0x60] sm:$0xff]
    %v233 = vld [vmem:[#allocation6 + $0x68] sm:$0xff]
    %v234 = vld [vmem:[#allocation6 + $0x70] sm:$0xff]
    %v235 = vld [vmem:[#allocation6 + $0x78] sm:$0xff]
    %236 = vmatprep.subr.mxu0 0.0
    %237 = vmatpush1.msra.mxu0 %v220
    %238 = vmatprep.subr.mxu0 0.0
    %239 = vmatpush1.msra.mxu0 %v221
    %240 = vmatprep.subr.mxu0 0.0
    %241 = vmatpush1.msra.mxu0 %v222
    %242 = vmatprep.subr.mxu0 0.0
    %243 = vmatpush1.msra.mxu0 %v223
    %244 = vmatprep.subr.mxu0 0.0
    %245 = vmatpush1.msra.mxu0 %v224
    %246 = vmatprep.subr.mxu0 0.0
    %247 = vmatpush1.msra.mxu0 %v225
    %248 = vmatprep.subr.mxu0 0.0
    %249 = vmatpush1.msra.mxu0 %v226
    %250 = vmatprep.subr.mxu0 0.0
    %251 = vmatpush1.msra.mxu0 %v227
    %252 = vmatprep.subr.mxu0 0.0
    %253 = vmatpush1.msra.mxu0 %v228
    %254 = vmatprep.subr.mxu0 0.0
    %255 = vmatpush1.msra.mxu0 %v229
    %256 = vmatprep.subr.mxu0 0.0
    %257 = vmatpush1.msra.mxu0 %v230
    %258 = vmatprep.subr.mxu0 0.0
    %259 = vmatpush1.msra.mxu0 %v231
    %260 = vmatprep.subr.mxu0 0.0
    %261 = vmatpush1.msra.mxu0 %v232
    %262 = vmatprep.subr.mxu0 0.0
    %263 = vmatpush1.msra.mxu0 %v233
    %264 = vmatprep.subr.mxu0 0.0
    %265 = vmatpush1.msra.mxu0 %v234
    %266 = vmatprep.subr.mxu0 0.0
    %267 = vmatpush1.msra.mxu0 %v235
    %268 = vmatprep.subr.mxu0 0.0
    %269 = vmatpush1.msra.mxu0 0.0
    %270 = vmatprep.subr.mxu0 0.0
    %271 = vmatpush1.msra.mxu0 0.0
    %272 = vmatprep.subr.mxu0 0.0
    %273 = vmatpush1.msra.mxu0 0.0
    %274 = vmatprep.subr.mxu0 0.0
    %275 = vmatpush1.msra.mxu0 0.0
    %276 = vmatprep.subr.mxu0 0.0
    %277 = vmatpush1.msra.mxu0 0.0
    %278 = vmatprep.subr.mxu0 0.0
    %279 = vmatpush1.msra.mxu0 0.0
    %280 = vmatprep.subr.mxu0 0.0
    %281 = vmatpush1.msra.mxu0 0.0
    %282 = vmatprep.subr.mxu0 0.0
    %283 = vmatpush1.msra.mxu0 0.0
    %284 = vmatprep.subr.mxu0 0.0
    %285 = vmatpush1.msra.mxu0 0.0
    %286 = vmatprep.subr.mxu0 0.0
    %287 = vmatpush1.msra.mxu0 0.0
    %288 = vmatprep.subr.mxu0 0.0
    %289 = vmatpush1.msra.mxu0 0.0
    %290 = vmatprep.subr.mxu0 0.0
    %291 = vmatpush1.msra.mxu0 0.0
    %292 = vmatprep.subr.mxu0 0.0
    %293 = vmatpush1.msra.mxu0 0.0
    %294 = vmatprep.subr.mxu0 0.0
    %295 = vmatpush1.msra.mxu0 0.0
    %296 = vmatprep.subr.mxu0 0.0
    %297 = vmatpush1.msra.mxu0 0.0
    %298 = vmatprep.subr.mxu0 0.0
    %299 = vmatpush1.msra.mxu0 0.0
    %300 = vmatprep.mubr.f32.mxu0 0.0
    %301 = vmatmul.mubr.f32.gmra.mrb[0].mxu0 %v219
    %v302 = vpop.f32.mrb[0].mxu0
    %v303 = vadd.f32 0.0, %v302
    %v304 = vpop.f32.mrb[0].mxu0
    %305 = vdwg.mxu0
    %v306 = vld [vmem:[%s6 + $0x1] sm:$0x1]
    %v307 = vld [vmem:[%s6 + $0x6] sm:$0x1]
    %v308 = vrot.slane %v303, 4
    %v309 = vadd.f32 %v303, %v308
    %v310 = vrot.slane %v309, 2
    %v311 = vadd.f32 %v309, %v310
    %v312 = vrot.slane %v311, 1
    %v313 = vadd.f32 %v311, %v312
    %v314 = vmul.f32 %v303, %v303
    %v315 = vrot.slane %v314, 4
    %v316 = vadd.f32 %v314, %v315
    %v317 = vrot.slane %v316, 2
    %v318 = vadd.f32 %v316, %v317
    %v319 = vrot.slane %v318, 1
    %v320 = vadd.f32 %v318, %v319
    %v321 = vmul.f32 %v313, 0.125
    %v322 = vmul.f32 %v320, 0.125
    %v323 = vmul.f32 %v321, %v321
    %v324 = vsub.f32 %v322, %v323
    %v325 = vadd.f32 %v324, 1e-05
    %v326 = vrsqrt.pop %v325
    %v327 = vmul.f32 %v306, %v326
    %v328 = vmul.f32 %v321, %v327
    %v329 = vsub.f32 %v307, %v328
    %v330 = vlaneseq
    %v331 = vshrl.u32 %v330, 7
    %v332 = vsub.s32 0, %v331
    %v333 = vrot.slane %v327, %v332
    %v334 = vmul.f32 %v303, %v333
    %v335 = vlaneseq
    %v336 = vshrl.u32 %v335, 7
    %v337 = vsub.s32 0, %v336
    %v338 = vrot.slane %v329, %v337
    %v339 = vadd.f32 %v334, %v338
    %v340 = vmax.f32 %v339, 0.0
    %v341 = vld [vmem:[#allocation7] sm:$0xff]
    %v342 = vld [vmem:[#allocation7 + $0x8] sm:$0xff]
    %v343 = vld [vmem:[#allocation7 + $0x10] sm:$0xff]
    %v344 = vld [vmem:[#allocation7 + $0x18] sm:$0xff]
    %v345 = vld [vmem:[#allocation7 + $0x20] sm:$0xff]
    %v346 = vld [vmem:[#allocation7 + $0x28] sm:$0xff]
    %v347 = vld [vmem:[#allocation7 + $0x30] sm:$0xff]
    %v348 = vld [vmem:[#allocation7 + $0x38] sm:$0xff]
    %v349 = vld [vmem:[#allocation7 + $0x40] sm:$0xff]
    %v350 = vld [vmem:[#allocation7 + $0x48] sm:$0xff]
    %v351 = vld [vmem:[#allocation7 + $0x50] sm:$0xff]
    %v352 = vld [vmem:[#allocation7 + $0x58] sm:$0xff]
    %v353 = vld [vmem:[#allocation7 + $0x60] sm:$0xff]
    %v354 = vld [vmem:[#allocation7 + $0x68] sm:$0xff]
    %v355 = vld [vmem:[#allocation7 + $0x70] sm:$0xff]
    %v356 = vld [vmem:[#allocation7 + $0x78] sm:$0xff]
    %357 = vmatprep.subr.mxu0 0.0
    %358 = vmatpush1.msra.mxu0 %v341
    %359 = vmatprep.subr.mxu0 0.0
    %360 = vmatpush1.msra.mxu0 %v342
    %361 = vmatprep.subr.mxu0 0.0
    %362 = vmatpush1.msra.mxu0 %v343
    %363 = vmatprep.subr.mxu0 0.0
    %364 = vmatpush1.msra.mxu0 %v344
    %365 = vmatprep.subr.mxu0 0.0
    %366 = vmatpush1.msra.mxu0 %v345
    %367 = vmatprep.subr.mxu0 0.0
    %368 = vmatpush1.msra.mxu0 %v346
    %369 = vmatprep.subr.mxu0 0.0
    %370 = vmatpush1.msra.mxu0 %v347
    %371 = vmatprep.subr.mxu0 0.0
    %372 = vmatpush1.msra.mxu0 %v348
    %373 = vmatprep.subr.mxu0 0.0
    %374 = vmatpush1.msra.mxu0 %v349
    %375 = vmatprep.subr.mxu0 0.0
    %376 = vmatpush1.msra.mxu0 %v350
    %377 = vmatprep.subr.mxu0 0.0
    %378 = vmatpush1.msra.mxu0 %v351
    %379 = vmatprep.subr.mxu0 0.0
    %380 = vmatpush1.msra.mxu0 %v352
    %381 = vmatprep.subr.mxu0 0.0
    %382 = vmatpush1.msra.mxu0 %v353
    %383 = vmatprep.subr.mxu0 0.0
    %384 = vmatpush1.msra.mxu0 %v354
    %385 = vmatprep.subr.mxu0 0.0
    %386 = vmatpush1.msra.mxu0 %v355
    %387 = vmatprep.subr.mxu0 0.0
    %388 = vmatpush1.msra.mxu0 %v356
    %389 = vmatprep.subr.mxu0 0.0
    %390 = vmatpush1.msra.mxu0 0.0
    %391 = vmatprep.subr.mxu0 0.0
    %392 = vmatpush1.msra.mxu0 0.0
    %393 = vmatprep.subr.mxu0 0.0
    %394 = vmatpush1.msra.mxu0 0.0
    %395 = vmatprep.subr.mxu0 0.0
    %396 = vmatpush1.msra.mxu0 0.0
    %397 = vmatprep.subr.mxu0 0.0
    %398 = vmatpush1.msra.mxu0 0.0
    %399 = vmatprep.subr.mxu0 0.0
    %400 = vmatpush1.msra.mxu0 0.0
    %401 = vmatprep.subr.mxu0 0.0
    %402 = vmatpush1.msra.mxu0 0.0
    %403 = vmatprep.subr.mxu0 0.0
    %404 = vmatpush1.msra.mxu0 0.0
    %405 = vmatprep.subr.mxu0 0.0
    %406 = vmatpush1.msra.mxu0 0.0
    %407 = vmatprep.subr.mxu0 0.0
    %408 = vmatpush1.msra.mxu0 0.0
    %409 = vmatprep.subr.mxu0 0.0
    %410 = vmatpush1.msra.mxu0 0.0
    %411 = vmatprep.subr.mxu0 0.0
    %412 = vmatpush1.msra.mxu0 0.0
    %413 = vmatprep.subr.mxu0 0.0
    %414 = vmatpush1.msra.mxu0 0.0
    %415 = vmatprep.subr.mxu0 0.0
    %416 = vmatpush1.msra.mxu0 0.0
    %417 = vmatprep.subr.mxu0 0.0
    %418 = vmatpush1.msra.mxu0 0.0
    %419 = vmatprep.subr.mxu0 0.0
    %420 = vmatpush1.msra.mxu0 0.0
    %421 = vmatprep.mubr.f32.mxu0 0.0
    %422 = vmatmul.mubr.f32.gmra.mrb[0].mxu0 %v340
    %v423 = vpop.f32.mrb[0].mxu0
    %v424 = vadd.f32 0.0, %v423
    %v425 = vpop.f32.mrb[0].mxu0
    %426 = vdwg.mxu0
    %v427 = vld [vmem:[%s6 + $0x2] sm:$0x1]
    %v428 = vld [vmem:[%s6 + $0x7] sm:$0x1]
    %v429 = vrot.slane %v424, 4
    %v430 = vadd.f32 %v424, %v429
    %v431 = vrot.slane %v430, 2
    %v432 = vadd.f32 %v430, %v431
    %v433 = vrot.slane %v432, 1
    %v434 = vadd.f32 %v432, %v433
    %v435 = vmul.f32 %v424, %v424
    %v436 = vrot.slane %v435, 4
    %v437 = vadd.f32 %v435, %v436
    %v438 = vrot.slane %v437, 2
    %v439 = vadd.f32 %v437, %v438
    %v440 = vrot.slane %v439, 1
    %v441 = vadd.f32 %v439, %v440
    %v442 = vmul.f32 %v434, 0.125
    %v443 = vmul.f32 %v441, 0.125
    %v444 = vmul.f32 %v442, %v442
    %v445 = vsub.f32 %v443, %v444
    %v446 = vadd.f32 %v445, 1e-05
    %v447 = vrsqrt.pop %v446
    %v448 = vmul.f32 %v427, %v447
    %v449 = vmul.f32 %v442, %v448
    %v450 = vsub.f32 %v428, %v449
    %v451 = vlaneseq
    %v452 = vshrl.u32 %v451, 7
    %v453 = vsub.s32 0, %v452
    %v454 = vrot.slane %v448, %v453
    %v455 = vmul.f32 %v424, %v454
    %v456 = vlaneseq
    %v457 = vshrl.u32 %v456, 7
    %v458 = vsub.s32 0, %v457
    %v459 = vrot.slane %v450, %v458
    %v460 = vadd.f32 %v455, %v459
    %v461 = vmax.f32 %v460, 0.0
    %v462 = vld [vmem:[#allocation9] sm:$0xff]
    %v463 = vld [vmem:[#allocation9 + $0x8] sm:$0xff]
    %v464 = vld [vmem:[#allocation9 + $0x10] sm:$0xff]
    %v465 = vld [vmem:[#allocation9 + $0x18] sm:$0xff]
    %v466 = vld [vmem:[#allocation9 + $0x20] sm:$0xff]
    %v467 = vld [vmem:[#allocation9 + $0x28] sm:$0xff]
    %v468 = vld [vmem:[#allocation9 + $0x30] sm:$0xff]
    %v469 = vld [vmem:[#allocation9 + $0x38] sm:$0xff]
    %v470 = vld [vmem:[#allocation9 + $0x40] sm:$0xff]
    %v471 = vld [vmem:[#allocation9 + $0x48] sm:$0xff]
    %v472 = vld [vmem:[#allocation9 + $0x50] sm:$0xff]
    %v473 = vld [vmem:[#allocation9 + $0x58] sm:$0xff]
    %v474 = vld [vmem:[#allocation9 + $0x60] sm:$0xff]
    %v475 = vld [vmem:[#allocation9 + $0x68] sm:$0xff]
    %v476 = vld [vmem:[#allocation9 + $0x70] sm:$0xff]
    %v477 = vld [vmem:[#allocation9 + $0x78] sm:$0xff]
    %478 = vmatprep.subr.mxu0 0.0
    %479 = vmatpush1.msra.mxu0 %v462
    %480 = vmatprep.subr.mxu0 0.0
    %481 = vmatpush1.msra.mxu0 %v463
    %482 = vmatprep.subr.mxu0 0.0
    %483 = vmatpush1.msra.mxu0 %v464
    %484 = vmatprep.subr.mxu0 0.0
    %485 = vmatpush1.msra.mxu0 %v465
    %486 = vmatprep.subr.mxu0 0.0
    %487 = vmatpush1.msra.mxu0 %v466
    %488 = vmatprep.subr.mxu0 0.0
    %489 = vmatpush1.msra.mxu0 %v467
    %490 = vmatprep.subr.mxu0 0.0
    %491 = vmatpush1.msra.mxu0 %v468
    %492 = vmatprep.subr.mxu0 0.0
    %493 = vmatpush1.msra.mxu0 %v469
    %494 = vmatprep.subr.mxu0 0.0
    %495 = vmatpush1.msra.mxu0 %v470
    %496 = vmatprep.subr.mxu0 0.0
    %497 = vmatpush1.msra.mxu0 %v471
    %498 = vmatprep.subr.mxu0 0.0
    %499 = vmatpush1.msra.mxu0 %v472
    %500 = vmatprep.subr.mxu0 0.0
    %501 = vmatpush1.msra.mxu0 %v473
    %502 = vmatprep.subr.mxu0 0.0
    %503 = vmatpush1.msra.mxu0 %v474
    %504 = vmatprep.subr.mxu0 0.0
    %505 = vmatpush1.msra.mxu0 %v475
    %506 = vmatprep.subr.mxu0 0.0
    %507 = vmatpush1.msra.mxu0 %v476
    %508 = vmatprep.subr.mxu0 0.0
    %509 = vmatpush1.msra.mxu0 %v477
    %510 = vmatprep.subr.mxu0 0.0
    %511 = vmatpush1.msra.mxu0 0.0
    %512 = vmatprep.subr.mxu0 0.0
    %513 = vmatpush1.msra.mxu0 0.0
    %514 = vmatprep.subr.mxu0 0.0
    %515 = vmatpush1.msra.mxu0 0.0
    %516 = vmatprep.subr.mxu0 0.0
    %517 = vmatpush1.msra.mxu0 0.0
    %518 = vmatprep.subr.mxu0 0.0
    %519 = vmatpush1.msra.mxu0 0.0
    %520 = vmatprep.subr.mxu0 0.0
    %521 = vmatpush1.msra.mxu0 0.0
    %522 = vmatprep.subr.mxu0 0.0
    %523 = vmatpush1.msra.mxu0 0.0
    %524 = vmatprep.subr.mxu0 0.0
    %525 = vmatpush1.msra.mxu0 0.0
    %526 = vmatprep.subr.mxu0 0.0
    %527 = vmatpush1.msra.mxu0 0.0
    %528 = vmatprep.subr.mxu0 0.0
    %529 = vmatpush1.msra.mxu0 0.0
    %530 = vmatprep.subr.mxu0 0.0
    %531 = vmatpush1.msra.mxu0 0.0
    %532 = vmatprep.subr.mxu0 0.0
    %533 = vmatpush1.msra.mxu0 0.0
    %534 = vmatprep.subr.mxu0 0.0
    %535 = vmatpush1.msra.mxu0 0.0
    %536 = vmatprep.subr.mxu0 0.0
    %537 = vmatpush1.msra.mxu0 0.0
    %538 = vmatprep.subr.mxu0 0.0
    %539 = vmatpush1.msra.mxu0 0.0
    %540 = vmatprep.subr.mxu0 0.0
    %541 = vmatpush1.msra.mxu0 0.0
    %542 = vmatprep.mubr.f32.mxu0 0.0
    %543 = vmatmul.mubr.f32.gmra.mrb[0].mxu0 %v461
    %v544 = vpop.f32.mrb[0].mxu0
    %v545 = vadd.f32 0.0, %v544
    %v546 = vpop.f32.mrb[0].mxu0
    %547 = vdwg.mxu0
    %v548 = vld [vmem:[%s6 + $0x3] sm:$0x1]
    %v549 = vld [vmem:[%s6 + $0x8] sm:$0x1]
    %v550 = vrot.slane %v545, 4
    %v551 = vadd.f32 %v545, %v550
    %v552 = vrot.slane %v551, 2
    %v553 = vadd.f32 %v551, %v552
    %v554 = vrot.slane %v553, 1
    %v555 = vadd.f32 %v553, %v554
    %v556 = vmul.f32 %v545, %v545
    %v557 = vrot.slane %v556, 4
    %v558 = vadd.f32 %v556, %v557
    %v559 = vrot.slane %v558, 2
    %v560 = vadd.f32 %v558, %v559
    %v561 = vrot.slane %v560, 1
    %v562 = vadd.f32 %v560, %v561
    %v563 = vmul.f32 %v555, 0.125
    %v564 = vmul.f32 %v562, 0.125
    %v565 = vmul.f32 %v563, %v563
    %v566 = vsub.f32 %v564, %v565
    %v567 = vadd.f32 %v566, 1e-05
    %v568 = vrsqrt.pop %v567
    %v569 = vmul.f32 %v548, %v568
    %v570 = vmul.f32 %v563, %v569
    %v571 = vsub.f32 %v549, %v570
    %v572 = vlaneseq
    %v573 = vshrl.u32 %v572, 7
    %v574 = vsub.s32 0, %v573
    %v575 = vrot.slane %v569, %v574
    %v576 = vmul.f32 %v545, %v575
    %v577 = vlaneseq
    %v578 = vshrl.u32 %v577, 7
    %v579 = vsub.s32 0, %v578
    %v580 = vrot.slane %v571, %v579
    %v581 = vadd.f32 %v576, %v580
    %v582 = vmax.f32 %v581, 0.0
    %v583 = vld [vmem:[#allocation10] sm:$0xff]
    %v584 = vld [vmem:[#allocation10 + $0x8] sm:$0xff]
    %v585 = vld [vmem:[#allocation10 + $0x10] sm:$0xff]
    %v586 = vld [vmem:[#allocation10 + $0x18] sm:$0xff]
    %v587 = vld [vmem:[#allocation10 + $0x20] sm:$0xff]
    %v588 = vld [vmem:[#allocation10 + $0x28] sm:$0xff]
    %v589 = vld [vmem:[#allocation10 + $0x30] sm:$0xff]
    %v590 = vld [vmem:[#allocation10 + $0x38] sm:$0xff]
    %v591 = vld [vmem:[#allocation10 + $0x40] sm:$0xff]
    %v592 = vld [vmem:[#allocation10 + $0x48] sm:$0xff]
    %v593 = vld [vmem:[#allocation10 + $0x50] sm:$0xff]
    %v594 = vld [vmem:[#allocation10 + $0x58] sm:$0xff]
    %v595 = vld [vmem:[#allocation10 + $0x60] sm:$0xff]
    %v596 = vld [vmem:[#allocation10 + $0x68] sm:$0xff]
    %v597 = vld [vmem:[#allocation10 + $0x70] sm:$0xff]
    %v598 = vld [vmem:[#allocation10 + $0x78] sm:$0xff]
    %599 = vmatprep.subr.mxu0 0.0
    %600 = vmatpush1.msra.mxu0 %v583
    %601 = vmatprep.subr.mxu0 0.0
    %602 = vmatpush1.msra.mxu0 %v584
    %603 = vmatprep.subr.mxu0 0.0
    %604 = vmatpush1.msra.mxu0 %v585
    %605 = vmatprep.subr.mxu0 0.0
    %606 = vmatpush1.msra.mxu0 %v586
    %607 = vmatprep.subr.mxu0 0.0
    %608 = vmatpush1.msra.mxu0 %v587
    %609 = vmatprep.subr.mxu0 0.0
    %610 = vmatpush1.msra.mxu0 %v588
    %611 = vmatprep.subr.mxu0 0.0
    %612 = vmatpush1.msra.mxu0 %v589
    %613 = vmatprep.subr.mxu0 0.0
    %614 = vmatpush1.msra.mxu0 %v590
    %615 = vmatprep.subr.mxu0 0.0
    %616 = vmatpush1.msra.mxu0 %v591
    %617 = vmatprep.subr.mxu0 0.0
    %618 = vmatpush1.msra.mxu0 %v592
    %619 = vmatprep.subr.mxu0 0.0
    %620 = vmatpush1.msra.mxu0 %v593
    %621 = vmatprep.subr.mxu0 0.0
    %622 = vmatpush1.msra.mxu0 %v594
    %623 = vmatprep.subr.mxu0 0.0
    %624 = vmatpush1.msra.mxu0 %v595
    %625 = vmatprep.subr.mxu0 0.0
    %626 = vmatpush1.msra.mxu0 %v596
    %627 = vmatprep.subr.mxu0 0.0
    %628 = vmatpush1.msra.mxu0 %v597
    %629 = vmatprep.subr.mxu0 0.0
    %630 = vmatpush1.msra.mxu0 %v598
    %631 = vmatprep.subr.mxu0 0.0
    %632 = vmatpush1.msra.mxu0 0.0
    %633 = vmatprep.subr.mxu0 0.0
    %634 = vmatpush1.msra.mxu0 0.0
    %635 = vmatprep.subr.mxu0 0.0
    %636 = vmatpush1.msra.mxu0 0.0
    %637 = vmatprep.subr.mxu0 0.0
    %638 = vmatpush1.msra.mxu0 0.0
    %639 = vmatprep.subr.mxu0 0.0
    %640 = vmatpush1.msra.mxu0 0.0
    %641 = vmatprep.subr.mxu0 0.0
    %642 = vmatpush1.msra.mxu0 0.0
    %643 = vmatprep.subr.mxu0 0.0
    %644 = vmatpush1.msra.mxu0 0.0
    %645 = vmatprep.subr.mxu0 0.0
    %646 = vmatpush1.msra.mxu0 0.0
    %647 = vmatprep.subr.mxu0 0.0
    %648 = vmatpush1.msra.mxu0 0.0
    %649 = vmatprep.subr.mxu0 0.0
    %650 = vmatpush1.msra.mxu0 0.0
    %651 = vmatprep.subr.mxu0 0.0
    %652 = vmatpush1.msra.mxu0 0.0
    %653 = vmatprep.subr.mxu0 0.0
    %654 = vmatpush1.msra.mxu0 0.0
    %655 = vmatprep.subr.mxu0 0.0
    %656 = vmatpush1.msra.mxu0 0.0
    %657 = vmatprep.subr.mxu0 0.0
    %658 = vmatpush1.msra.mxu0 0.0
    %659 = vmatprep.subr.mxu0 0.0
    %660 = vmatpush1.msra.mxu0 0.0
    %661 = vmatprep.subr.mxu0 0.0
    %662 = vmatpush1.msra.mxu0 0.0
    %663 = vmatprep.mubr.f32.mxu0 0.0
    %664 = vmatmul.mubr.f32.gmra.mrb[0].mxu0 %v582
    %v665 = vpop.f32.mrb[0].mxu0
    %v666 = vadd.f32 0.0, %v665
    %v667 = vpop.f32.mrb[0].mxu0
    %668 = vdwg.mxu0
    %v669 = vld [vmem:[%s6 + $0x4] sm:$0x1]
    %v670 = vld [vmem:[%s6 + $0x9] sm:$0x1]
    %v671 = vrot.slane %v666, 4
    %v672 = vadd.f32 %v666, %v671
    %v673 = vrot.slane %v672, 2
    %v674 = vadd.f32 %v672, %v673
    %v675 = vrot.slane %v674, 1
    %v676 = vadd.f32 %v674, %v675
    %v677 = vmul.f32 %v666, %v666
    %v678 = vrot.slane %v677, 4
    %v679 = vadd.f32 %v677, %v678
    %v680 = vrot.slane %v679, 2
    %v681 = vadd.f32 %v679, %v680
    %v682 = vrot.slane %v681, 1
    %v683 = vadd.f32 %v681, %v682
    %v684 = vmul.f32 %v676, 0.125
    %v685 = vmul.f32 %v683, 0.125
    %v686 = vmul.f32 %v684, %v684
    %v687 = vsub.f32 %v685, %v686
    %v688 = vadd.f32 %v687, 1e-05
    %v689 = vrsqrt.pop %v688
    %v690 = vmul.f32 %v669, %v689
    %v691 = vmul.f32 %v684, %v690
    %v692 = vsub.f32 %v670, %v691
    %v693 = vlaneseq
    %v694 = vshrl.u32 %v693, 7
    %v695 = vsub.s32 0, %v694
    %v696 = vrot.slane %v690, %v695
    %v697 = vmul.f32 %v666, %v696
    %v698 = vlaneseq
    %v699 = vshrl.u32 %v698, 7
    %v700 = vsub.s32 0, %v699
    %v701 = vrot.slane %v692, %v700
    %v702 = vadd.f32 %v697, %v701
    %v703 = vmax.f32 %v702, 0.0
    %v704 = vld [vmem:[%s6 + $0xa] sm:$0x1]
    %v705 = vld [vmem:[%s6 + $0xb] sm:$0x1]
    %v706 = vlaneseq
    %v707 = vshrl.u32 %v706, 7
    %v708 = vsub.s32 0, %v707
    %v709 = vrot.slane %v704, %v708
    %v710 = vmul.f32 %v703, %v709
    %711 = vadd.xlane.f32.xlu0 %v710
    %v712 = vpop.xlane.xlu0 %711
    %v713 = vlaneseq
    %v714 = vshrl.u32 %v713, 7
    %v715 = vsub.s32 0, %v714
    %v716 = vrot.slane %v705, %v715
    %v717 = vadd.f32 %v712, %v716
    %vm718 = vcmask 7168
    %719 = vst.msk [vmem:[%s7] sm:$0xff] %vm718, %v717
    // Predicated region
    $region54: #{model2pca_forward.1} parent=1 // pred_check
      _
    $region55: #{model2pca_forward.1} parent=1 // pred_check_branch
      %721 = sbr.rel (0) target = $region57
    $region56: #{model2pca_forward.1} parent=1 // pred_region
      _
    $region57: #{model2pca_forward.1} parent=1 // pred_fallthru
      _
    // Predicated region
    $region58: #{model2pca_forward.1} parent=1 // pred_check
      _
    $region59: #{model2pca_forward.1} parent=1 // pred_check_branch
      %723 = sbr.rel (0) target = $region61
    $region60: #{model2pca_forward.1} parent=1 // pred_region
      _
    $region61: #{model2pca_forward.1} parent=1 // pred_fallthru
      _
    %724 = vsyncpa [#allocation3], 1
    %725 = vsyncpa [#allocation5], 1
    %726 = vsyncpa [#allocation8], 1
    %727 = vsyncpa [#allocation11], 1

</llo_original>
